<compile_context>
chip_gen: v7x
topology: tpu7x:2x2x1
jax: 0.10.0
libtpu: 0.0.40
codegen_flags: <defaults>
</compile_context>

<pallas_src>
import functools

import numpy as np
import jax
import jax.numpy as jnp
from jax.experimental import pallas as pl
from jax.experimental.pallas import tpu as pltpu

INPUT_SIZE = 4            # first LSTM layer input size (loss[2] ++ grad_prep[2])
HIDDEN = 20               # first LSTM layer hidden size
N_PARAMS = 64             # n_learner_params (small deterministic example)
GATE_PAD = 128            # each live LSTM gate (i, g, o) padded to its own 128-lane chunk
SLAB_W = 3 * GATE_PAD     # packed small-output slab: [ h_pad | c_pad | fi_pad ]


def _metalearner_kernel(x_ref, grad_ref, cprev_ref, wg_ref, bg_ref, wm_ref, cb_ref,
                        c_next_ref, slab_ref, sigf_c_ref, sigi_ref):
    j = pl.program_id(1)

    # Per-row-tile work runs once (first column tile); everything later column tiles
    # need is cached in VMEM scratch so the inner j loop is outer-product + store only.
    @pl.when(j == 0)
    def _():
        # ---------------- nn.LSTMCell (hs=None  =>  h0 = c0 = 0) ----------------
        # K == 4, so the gate pre-activations are cheaper (and exact f32) as four
        # broadcast multiply-adds on the VPU than as an MXU matmul.
        x = x_ref[...]                       # [rt, 4]   f32
        wg = wg_ref[...]                     # [4, 384]  f32 (i|g|o, 128-lane aligned)
        gates = bg_ref[...]                  # [1, 384]  f32 (bias_ih + bias_hh)
        for k in range(wg.shape[0]):         # static K = 4, unrolled
            gates = gates + x[:, k:k + 1] * wg[k:k + 1, :]

        i_g = jax.nn.sigmoid(gates[:, 0:GATE_PAD])
        g_g = jnp.tanh(gates[:, GATE_PAD:2 * GATE_PAD])
        o_g = jax.nn.sigmoid(gates[:, 2 * GATE_PAD:3 * GATE_PAD])
        c_new = i_g * g_g                    # forget-gate term vanishes (c0 == 0)
        h_new = o_g * jnp.tanh(c_new)        # [rt, 128]; lanes H: are exactly 0

        # ------- MetaLSTMCell (hs=None => f_prev = i_prev = 0, c_prev = cI) -------
        c_prev = cprev_ref[...]              # [rt, 1] f32
        cb = cb_ref[...]                     # [2, 128]: row0 = c_prev coeffs, row1 = bias
        fi = jnp.dot(h_new, wm_ref[...], preferred_element_type=jnp.float32)  # [rt,128]
        fi = fi + c_prev * cb[0:1, :] + cb[1:2, :]   # lane0 = f_next, lane1 = i_next

        sig = jax.nn.sigmoid(fi)
        sigf_c_ref[...] = sig[:, 0:1] * c_prev       # sigmoid(f_next) * c_prev
        sigi_ref[...] = sig[:, 1:2]                  # sigmoid(i_next)

        # Single unmasked, 128-aligned store of all small outputs.
        slab_ref[...] = jnp.concatenate([h_new, c_new, fi], axis=1)

    # torch broadcasting reproduced exactly: [rt,1] - [rt,1]*[1,ct] -> [rt,ct]
    c_next_ref[...] = sigf_c_ref[...] - sigi_ref[...] * grad_ref[...]


def init_params(key, input_size=INPUT_SIZE, hidden_size=HIDDEN, n_params=N_PARAMS):
    ks = jax.random.split(key, 9)
    H = hidden_size
    k = 1.0 / float(np.sqrt(H))
    return {
        # nn.LSTMCell parameters (PyTorch shapes)
        "weight_ih": jax.random.uniform(ks[0], (4 * H, input_size), jnp.float32, -k, k),
        "weight_hh": jax.random.uniform(ks[1], (4 * H, H), jnp.float32, -k, k),
        "bias_ih": jax.random.uniform(ks[2], (4 * H,), jnp.float32, -k, k),
        "bias_hh": jax.random.uniform(ks[3], (4 * H,), jnp.float32, -k, k),
        # MetaLSTMCell parameters
        "WF": jax.random.uniform(ks[4], (H + 2, 1), jnp.float32, -0.01, 0.01),
        "WI": jax.random.uniform(ks[5], (H + 2, 1), jnp.float32, -0.01, 0.01),
        "cI": jax.random.uniform(ks[6], (n_params, 1), jnp.float32, -0.01, 0.01),
        "bF": jax.random.uniform(ks[7], (1, 1), jnp.float32, 4.0, 6.0),
        "bI": jax.random.uniform(ks[8], (1, 1), jnp.float32, -5.0, -4.0),
    }


def preprocess_params(params, hidden_size=HIDDEN):
    """One-time layout prep hoisted out of the per-call path."""
    H = hidden_size
    W_ih = params["weight_ih"]                       # [4H, in], torch gate order i,f,g,o
    bias = params["bias_ih"] + params["bias_hh"]     # [4H]

    def pad_w(g):   # [H, in] -> [in, 128]  (transpose + zero-pad lanes)
        return jnp.pad(g.T, ((0, 0), (0, GATE_PAD - H)))

    def pad_b(b):   # [H] -> [128]
        return jnp.pad(b, (0, GATE_PAD - H))

    # Drop the forget gate (dead on the hs=None cold-start path, c0 == 0) and give each
    # live gate its own 128-lane-aligned chunk so in-kernel slices are free vreg views.
    w_gates = jnp.concatenate([pad_w(W_ih[0 * H:1 * H]),
                               pad_w(W_ih[2 * H:3 * H]),
                               pad_w(W_ih[3 * H:4 * H])], axis=1)             # [in, 384]
    b_gates = jnp.concatenate([pad_b(bias[0 * H:1 * H]),
                               pad_b(bias[2 * H:3 * H]),
                               pad_b(bias[3 * H:4 * H])]).reshape(1, SLAB_W)  # [1, 384]

    WF, WI = params["WF"], params["WI"]              # [H+2, 1]
    # meta weights padded to a [128, 128] slab-ready matmul: col0 = WF[:H], col1 = WI[:H]
    w_meta = jnp.zeros((GATE_PAD, GATE_PAD), jnp.float32)
    w_meta = w_meta.at[:H, 0].set(WF[:H, 0]).at[:H, 1].set(WI[:H, 0])
    # scalar terms: row0 = c_prev coefficients (WF[H], WI[H]); row1 = (bF, bI)
    cb = jnp.zeros((2, GATE_PAD), jnp.float32)
    cb = cb.at[0, 0].set(WF[H, 0]).at[0, 1].set(WI[H, 0])
    cb = cb.at[1, 0].set(params["bF"][0, 0]).at[1, 1].set(params["bI"][0, 0])

    return {
        "w_gates": w_gates.astype(jnp.float32),   # [4, 384]
        "b_gates": b_gates.astype(jnp.float32),   # [1, 384]
        "w_meta": w_meta,                         # [128, 128]
        "cb": cb,                                 # [2, 128]
        "cI": params["cI"].astype(jnp.float32),   # [n, 1]
    }


@functools.partial(jax.jit, static_argnames=("hidden_size", "row_tile", "col_tile"))
def meta_learner_forward(pp, loss, grad_prep, grad, *, hidden_size=HIDDEN,
                         row_tile=None, col_tile=None):
    """inputs = [loss [1,2], grad_prep [n,2], grad [n]]; hs=None cold-start path."""
    # TODO(synk): warm-start (hs != None) path needs the h @ W_hh matmul and the
    # f_prev / i_prev terms; only the cold-start path the module uses by default is here.
    H = hidden_size
    n = grad_prep.shape[0]
    in_dim = pp["w_gates"].shape[0]

    # per-call glue (input dependent; fused under jit)
    loss_e = jnp.broadcast_to(loss, grad_prep.shape)
    x = jnp.concatenate([loss_e, grad_prep], axis=1).astype(jnp.float32)   # [n, 4]
    grad_row = grad.reshape(1, n).astype(jnp.float32)                      # [1, n]
    c_prev = pp["cI"]                                                      # [n, 1]

    # 2-D grid: rows "parallel" (TensorCore sharding on v7x), columns "arbitrary"
    # (sequential; per-row work runs once at j == 0 and is reused from scratch).
    if row_tile is None:
        row_tile = n if n <= 256 else 256
    if col_tile is None:
        col_tile = n if n <= 2048 else 2048
    # TODO(synk): pad n to a multiple of the tile sizes for arbitrary n_learner_params.
    assert n % row_tile == 0 and n % col_tile == 0
    assert row_tile == n or row_tile % 8 == 0
    assert col_tile == n or col_tile % 128 == 0
    grid = (n // row_tile, n // col_tile)

    c_next, slab = pl.pallas_call(
        _metalearner_kernel,
        out_shape=(
            # f32 kept for torch-exact numerics; cast to bf16 here to halve the n^2
            # writeback if downstream tolerates it.
            jax.ShapeDtypeStruct((n, n), jnp.float32),        # c_next ([n,1]*[n] torch bcast)
            jax.ShapeDtypeStruct((n, SLAB_W), jnp.float32),   # packed h | c | (f_next,i_next)
        ),
        grid_spec=pltpu.PrefetchScalarGridSpec(
            num_scalar_prefetch=0,
            grid=grid,
            in_specs=[
                pl.BlockSpec((row_tile, in_dim), lambda i, j: (i, 0)),    # x
                pl.BlockSpec((1, col_tile), lambda i, j: (0, j)),         # grad (row vector)
                pl.BlockSpec((row_tile, 1), lambda i, j: (i, 0)),         # c_prev (cI)
                pl.BlockSpec((in_dim, SLAB_W), lambda i, j: (0, 0)),      # fused gate weights
                pl.BlockSpec((1, SLAB_W), lambda i, j: (0, 0)),           # fused gate bias
                pl.BlockSpec((GATE_PAD, GATE_PAD), lambda i, j: (0, 0)),  # meta weights
                pl.BlockSpec((2, GATE_PAD), lambda i, j: (0, 0)),         # meta scalars
            ],
            out_specs=(
                pl.BlockSpec((row_tile, col_tile), lambda i, j: (i, j)),
                pl.BlockSpec((row_tile, SLAB_W), lambda i, j: (i, 0)),
            ),
            scratch_shapes=[
                pltpu.VMEM((row_tile, 1), jnp.float32),   # cached sigmoid(f_next) * c_prev
                pltpu.VMEM((row_tile, 1), jnp.float32),   # cached sigmoid(i_next)
            ],
        ),
        compiler_params=pltpu.CompilerParams(
            dimension_semantics=("parallel", "arbitrary"),
            vmem_limit_bytes=48 * 1024 * 1024,
        ),
    )(x, grad_row, c_prev, pp["w_gates"], pp["b_gates"], pp["w_meta"], pp["cb"])

    lstm_hx = slab[:, 0:H]
    lstm_cx = slab[:, GATE_PAD:GATE_PAD + H]
    f_next = slab[:, 2 * GATE_PAD:2 * GATE_PAD + 1]
    i_next = slab[:, 2 * GATE_PAD + 1:2 * GATE_PAD + 2]

    flat_learner = jnp.squeeze(c_next)   # == flat_learner_unsqzd.squeeze()
    return flat_learner, [(lstm_hx, lstm_cx), [f_next, i_next, c_next]]


def _reference(params, loss, grad_prep, grad, hidden_size=HIDDEN):
    """Pure-JAX f32 reimplementation of the PyTorch forward (hs=None path)."""
    H = hidden_size
    n = grad_prep.shape[0]
    loss_e = jnp.broadcast_to(loss, grad_prep.shape)
    x = jnp.concatenate([loss_e, grad_prep], axis=1)
    gates = x @ params["weight_ih"].T + params["bias_ih"] + params["bias_hh"]  # h0 = 0
    i = jax.nn.sigmoid(gates[:, :H])
    g = jnp.tanh(gates[:, 2 * H:3 * H])
    o = jax.nn.sigmoid(gates[:, 3 * H:])
    c = i * g                      # c0 = 0
    h = o * jnp.tanh(c)
    c_prev = params["cI"]
    zeros1 = jnp.zeros((n, 1), jnp.float32)
    f_next = jnp.concatenate([h, c_prev, zeros1], 1) @ params["WF"] + params["bF"]
    i_next = jnp.concatenate([h, c_prev, zeros1], 1) @ params["WI"] + params["bI"]
    c_next = jax.nn.sigmoid(f_next) * c_prev - jax.nn.sigmoid(i_next) * grad[None, :]
    return jnp.squeeze(c_next), h


if __name__ == "__main__":
    key = jax.random.PRNGKey(0)

    def run_case(case_key, n_params, row_tile=None, col_tile=None):
        kp, k1, k2, k3 = jax.random.split(case_key, 4)
        params = init_params(kp, n_params=n_params)
        pp = preprocess_params(params)   # one-time layout prep (not per call)

        loss = jax.random.normal(k1, (1, 2), jnp.float32)
        grad_prep = jax.random.normal(k2, (n_params, 2), jnp.float32)
        grad = jax.random.normal(k3, (n_params,), jnp.float32)

        flat, hs = meta_learner_forward(pp, loss, grad_prep, grad,
                                        row_tile=row_tile, col_tile=col_tile)
        flat = jax.block_until_ready(flat)

        ref_flat, ref_h = _reference(params, loss, grad_prep, grad)
        assert flat.shape == (n_params, n_params)
        # all-f32 path -> tight tolerances (only transcendental / MXU-pass differences)
        np.testing.assert_allclose(np.asarray(flat), np.asarray(ref_flat),
                                   rtol=1e-3, atol=1e-4)
        np.testing.assert_allclose(np.asarray(hs[0][0]), np.asarray(ref_h),
                                   rtol=1e-3, atol=1e-5)

    k_small, k_big = jax.random.split(key)
    run_case(k_small, N_PARAMS)                              # grid (1, 1): tiny default case
    run_case(k_big, 1024, row_tile=256, col_tile=512)        # grid (4, 2): exercises the
                                                             # 2-D tiling + pl.when(j==0) path
    print("KERNEL_OK")
</pallas_src>

<mosaic_0001>
module attributes {stable_mosaic.version = 11 : i64} {
  func.func @_metalearner_kernel(%arg0: i32, %arg1: i32, %arg2: memref<64x4xf32, #tpu.memory_space<vmem>>, %arg3: memref<1x64xf32, #tpu.memory_space<vmem>>, %arg4: memref<64x1xf32, #tpu.memory_space<vmem>>, %arg5: memref<4x384xf32, #tpu.memory_space<vmem>>, %arg6: memref<1x384xf32, #tpu.memory_space<vmem>>, %arg7: memref<128x128xf32, #tpu.memory_space<vmem>>, %arg8: memref<2x128xf32, #tpu.memory_space<vmem>>, %arg9: memref<64x64xf32, #tpu.memory_space<vmem>>, %arg10: memref<64x384xf32, #tpu.memory_space<vmem>>, %arg11: memref<64x1xf32, #tpu.memory_space<vmem>>, %arg12: memref<64x1xf32, #tpu.memory_space<vmem>>) attributes {dimension_semantics = [#tpu.dimension_semantics<parallel>, #tpu.dimension_semantics<arbitrary>], iteration_bounds = array<i64: 1, 1>, scalar_prefetch = 0 : i64, scratch_operands = 2 : i64, tpu.core_type = #tpu.core_type<tc>, window_params = [{transform_indices = @transform_0, window_bounds = array<i64: 64, 4>}, {transform_indices = @transform_1, window_bounds = array<i64: 1, 64>}, {transform_indices = @transform_2, window_bounds = array<i64: 64, 1>}, {pipeline_mode = #tpu.pipeline_mode<synchronous>, transform_indices = @transform_3, window_bounds = array<i64: 4, 384>}, {pipeline_mode = #tpu.pipeline_mode<synchronous>, transform_indices = @transform_4, window_bounds = array<i64: 1, 384>}, {pipeline_mode = #tpu.pipeline_mode<synchronous>, transform_indices = @transform_5, window_bounds = array<i64: 128, 128>}, {pipeline_mode = #tpu.pipeline_mode<synchronous>, transform_indices = @transform_6, window_bounds = array<i64: 2, 128>}, {transform_indices = @transform_7, window_bounds = array<i64: 64, 64>}, {transform_indices = @transform_8, window_bounds = array<i64: 64, 384>}]} {
    %c0_i32 = arith.constant 0 : i32
    %0 = arith.cmpi eq, %arg1, %c0_i32 : i32
    %1 = arith.extui %0 : i1 to i32
    %c0_i32_0 = arith.constant 0 : i32
    %2 = arith.cmpi ne, %1, %c0_i32_0 : i32
    scf.if %2 {
      %c0_8 = arith.constant 0 : index
      %c0_9 = arith.constant 0 : index
      %12 = vector.load %arg2[%c0_8, %c0_9] : memref<64x4xf32, #tpu.memory_space<vmem>>, vector<64x4xf32>
      %c0_10 = arith.constant 0 : index
      %c0_11 = arith.constant 0 : index
      %13 = vector.load %arg5[%c0_10, %c0_11] : memref<4x384xf32, #tpu.memory_space<vmem>>, vector<4x384xf32>
      %c0_12 = arith.constant 0 : index
      %c0_13 = arith.constant 0 : index
      %14 = vector.load %arg6[%c0_12, %c0_13] : memref<1x384xf32, #tpu.memory_space<vmem>>, vector<1x384xf32>
      %15 = vector.extract_strided_slice %12 {offsets = [0, 0], sizes = [64, 1], strides = [1, 1]} : vector<64x4xf32> to vector<64x1xf32>
      %16 = vector.extract_strided_slice %13 {offsets = [0, 0], sizes = [1, 384], strides = [1, 1]} : vector<4x384xf32> to vector<1x384xf32>
      %17 = vector.broadcast %15 : vector<64x1xf32> to vector<64x384xf32>
      %18 = vector.broadcast %16 : vector<1x384xf32> to vector<64x384xf32>
      %19 = arith.mulf %17, %18 : vector<64x384xf32>
      %20 = vector.broadcast %14 : vector<1x384xf32> to vector<64x384xf32>
      %21 = arith.addf %20, %19 : vector<64x384xf32>
      %22 = vector.extract_strided_slice %12 {offsets = [0, 1], sizes = [64, 1], strides = [1, 1]} : vector<64x4xf32> to vector<64x1xf32>
      %23 = vector.extract_strided_slice %13 {offsets = [1, 0], sizes = [1, 384], strides = [1, 1]} : vector<4x384xf32> to vector<1x384xf32>
      %24 = vector.broadcast %22 : vector<64x1xf32> to vector<64x384xf32>
      %25 = vector.broadcast %23 : vector<1x384xf32> to vector<64x384xf32>
      %26 = arith.mulf %24, %25 : vector<64x384xf32>
      %27 = arith.addf %21, %26 : vector<64x384xf32>
      %28 = vector.extract_strided_slice %12 {offsets = [0, 2], sizes = [64, 1], strides = [1, 1]} : vector<64x4xf32> to vector<64x1xf32>
      %29 = vector.extract_strided_slice %13 {offsets = [2, 0], sizes = [1, 384], strides = [1, 1]} : vector<4x384xf32> to vector<1x384xf32>
      %30 = vector.broadcast %28 : vector<64x1xf32> to vector<64x384xf32>
      %31 = vector.broadcast %29 : vector<1x384xf32> to vector<64x384xf32>
      %32 = arith.mulf %30, %31 : vector<64x384xf32>
      %33 = arith.addf %27, %32 : vector<64x384xf32>
      %34 = vector.extract_strided_slice %12 {offsets = [0, 3], sizes = [64, 1], strides = [1, 1]} : vector<64x4xf32> to vector<64x1xf32>
      %35 = vector.extract_strided_slice %13 {offsets = [3, 0], sizes = [1, 384], strides = [1, 1]} : vector<4x384xf32> to vector<1x384xf32>
      %36 = vector.broadcast %34 : vector<64x1xf32> to vector<64x384xf32>
      %37 = vector.broadcast %35 : vector<1x384xf32> to vector<64x384xf32>
      %38 = arith.mulf %36, %37 : vector<64x384xf32>
      %39 = arith.addf %33, %38 : vector<64x384xf32>
      %40 = vector.extract_strided_slice %39 {offsets = [0, 0], sizes = [64, 128], strides = [1, 1]} : vector<64x384xf32> to vector<64x128xf32>
      %41 = arith.negf %40 : vector<64x128xf32>
      %42 = math.exp %41 : vector<64x128xf32>
      %cst = arith.constant 1.000000e+00 : f32
      %43 = vector.broadcast %cst : f32 to vector<64x128xf32>
      %44 = arith.addf %43, %42 : vector<64x128xf32>
      %45 = arith.divf %43, %44 : vector<64x128xf32>
      %46 = vector.extract_strided_slice %39 {offsets = [0, 128], sizes = [64, 128], strides = [1, 1]} : vector<64x384xf32> to vector<64x128xf32>
      %47 = math.tanh %46 : vector<64x128xf32>
      %48 = vector.extract_strided_slice %39 {offsets = [0, 256], sizes = [64, 128], strides = [1, 1]} : vector<64x384xf32> to vector<64x128xf32>
      %49 = arith.negf %48 : vector<64x128xf32>
      %50 = math.exp %49 : vector<64x128xf32>
      %cst_14 = arith.constant 1.000000e+00 : f32
      %51 = vector.broadcast %cst_14 : f32 to vector<64x128xf32>
      %52 = arith.addf %51, %50 : vector<64x128xf32>
      %53 = arith.divf %51, %52 : vector<64x128xf32>
      %54 = arith.mulf %45, %47 : vector<64x128xf32>
      %55 = math.tanh %54 : vector<64x128xf32>
      %56 = arith.mulf %53, %55 : vector<64x128xf32>
      %c0_15 = arith.constant 0 : index
      %c0_16 = arith.constant 0 : index
      %57 = vector.load %arg4[%c0_15, %c0_16] : memref<64x1xf32, #tpu.memory_space<vmem>>, vector<64x1xf32>
      %c0_17 = arith.constant 0 : index
      %c0_18 = arith.constant 0 : index
      %58 = vector.load %arg8[%c0_17, %c0_18] : memref<2x128xf32, #tpu.memory_space<vmem>>, vector<2x128xf32>
      %c0_19 = arith.constant 0 : index
      %c0_20 = arith.constant 0 : index
      %59 = vector.load %arg7[%c0_19, %c0_20] : memref<128x128xf32, #tpu.memory_space<vmem>>, vector<128x128xf32>
      %cst_21 = arith.constant dense<0.000000e+00> : vector<64x128xf32>
      %60 = tpu.matmul %56, %59, %cst_21 {dimension_numbers = #tpu.dot_dimension_numbers<[1], [0], [0], [1], [0, 0, 1, 1], [], []>} : vector<64x128xf32>, vector<128x128xf32>, vector<64x128xf32> -> vector<64x128xf32>
      %61 = vector.extract_strided_slice %58 {offsets = [0, 0], sizes = [1, 128], strides = [1, 1]} : vector<2x128xf32> to vector<1x128xf32>
      %62 = vector.broadcast %57 : vector<64x1xf32> to vector<64x128xf32>
      %63 = vector.broadcast %61 : vector<1x128xf32> to vector<64x128xf32>
      %64 = arith.mulf %62, %63 : vector<64x128xf32>
      %65 = arith.addf %60, %64 : vector<64x128xf32>
      %66 = vector.extract_strided_slice %58 {offsets = [1, 0], sizes = [1, 128], strides = [1, 1]} : vector<2x128xf32> to vector<1x128xf32>
      %67 = vector.broadcast %66 : vector<1x128xf32> to vector<64x128xf32>
      %68 = arith.addf %65, %67 : vector<64x128xf32>
      %69 = arith.negf %68 : vector<64x128xf32>
      %70 = math.exp %69 : vector<64x128xf32>
      %cst_22 = arith.constant 1.000000e+00 : f32
      %71 = vector.broadcast %cst_22 : f32 to vector<64x128xf32>
      %72 = arith.addf %71, %70 : vector<64x128xf32>
      %73 = arith.divf %71, %72 : vector<64x128xf32>
      %74 = vector.extract_strided_slice %73 {offsets = [0, 0], sizes = [64, 1], strides = [1, 1]} : vector<64x128xf32> to vector<64x1xf32>
      %75 = arith.mulf %74, %57 : vector<64x1xf32>
      %c0_23 = arith.constant 0 : index
      %c0_24 = arith.constant 0 : index
      %76 = vector.load %arg11[%c0_23, %c0_24] : memref<64x1xf32, #tpu.memory_space<vmem>>, vector<64x1xf32>
      tpu.vector_store %arg11[%c0_23, %c0_24], %75 {strides = array<i32>} : memref<64x1xf32, #tpu.memory_space<vmem>>, vector<64x1xf32>,
      %77 = vector.extract_strided_slice %73 {offsets = [0, 1], sizes = [64, 1], strides = [1, 1]} : vector<64x128xf32> to vector<64x1xf32>
      %c0_25 = arith.constant 0 : index
      %c0_26 = arith.constant 0 : index
      %78 = vector.load %arg12[%c0_25, %c0_26] : memref<64x1xf32, #tpu.memory_space<vmem>>, vector<64x1xf32>
      tpu.vector_store %arg12[%c0_25, %c0_26], %77 {strides = array<i32>} : memref<64x1xf32, #tpu.memory_space<vmem>>, vector<64x1xf32>,
      %79 = tpu.concatenate %56, %54, %68 in 1 : vector<64x128xf32>, vector<64x128xf32>, vector<64x128xf32> -> vector<64x384xf32>
      %c0_27 = arith.constant 0 : index
      %c0_28 = arith.constant 0 : index
      %80 = vector.load %arg10[%c0_27, %c0_28] : memref<64x384xf32, #tpu.memory_space<vmem>>, vector<64x384xf32>
      tpu.vector_store %arg10[%c0_27, %c0_28], %79 {strides = array<i32>} : memref<64x384xf32, #tpu.memory_space<vmem>>, vector<64x384xf32>,
    } else {
    }
    %c0 = arith.constant 0 : index
    %c0_1 = arith.constant 0 : index
    %3 = vector.load %arg11[%c0, %c0_1] : memref<64x1xf32, #tpu.memory_space<vmem>>, vector<64x1xf32>
    %c0_2 = arith.constant 0 : index
    %c0_3 = arith.constant 0 : index
    %4 = vector.load %arg12[%c0_2, %c0_3] : memref<64x1xf32, #tpu.memory_space<vmem>>, vector<64x1xf32>
    %c0_4 = arith.constant 0 : index
    %c0_5 = arith.constant 0 : index
    %5 = vector.load %arg3[%c0_4, %c0_5] : memref<1x64xf32, #tpu.memory_space<vmem>>, vector<1x64xf32>
    %6 = vector.broadcast %4 : vector<64x1xf32> to vector<64x64xf32>
    %7 = vector.broadcast %5 : vector<1x64xf32> to vector<64x64xf32>
    %8 = arith.mulf %6, %7 : vector<64x64xf32>
    %9 = vector.broadcast %3 : vector<64x1xf32> to vector<64x64xf32>
    %10 = arith.subf %9, %8 : vector<64x64xf32>
    %c0_6 = arith.constant 0 : index
    %c0_7 = arith.constant 0 : index
    %11 = vector.load %arg9[%c0_6, %c0_7] : memref<64x64xf32, #tpu.memory_space<vmem>>, vector<64x64xf32>
    tpu.vector_store %arg9[%c0_6, %c0_7], %10 {strides = array<i32>} : memref<64x64xf32, #tpu.memory_space<vmem>>, vector<64x64xf32>,
    return
  }
  func.func @transform_0(%arg0: i32, %arg1: i32) -> (i32, i32) {
    %c0_i32 = arith.constant 0 : i32
    %c0_i32_0 = arith.constant 0 : i32
    return %arg0, %c0_i32 : i32, i32
  }
  func.func @transform_1(%arg0: i32, %arg1: i32) -> (i32, i32) {
    %c0_i32 = arith.constant 0 : i32
    %c0_i32_0 = arith.constant 0 : i32
    return %c0_i32, %arg1 : i32, i32
  }
  func.func @transform_2(%arg0: i32, %arg1: i32) -> (i32, i32) {
    %c0_i32 = arith.constant 0 : i32
    %c0_i32_0 = arith.constant 0 : i32
    return %arg0, %c0_i32 : i32, i32
  }
  func.func @transform_3(%arg0: i32, %arg1: i32) -> (i32, i32) {
    %c0_i32 = arith.constant 0 : i32
    %c0_i32_0 = arith.constant 0 : i32
    %c0_i32_1 = arith.constant 0 : i32
    return %c0_i32, %c0_i32_0 : i32, i32
  }
  func.func @transform_4(%arg0: i32, %arg1: i32) -> (i32, i32) {
    %c0_i32 = arith.constant 0 : i32
    %c0_i32_0 = arith.constant 0 : i32
    %c0_i32_1 = arith.constant 0 : i32
    return %c0_i32, %c0_i32_0 : i32, i32
  }
  func.func @transform_5(%arg0: i32, %arg1: i32) -> (i32, i32) {
    %c0_i32 = arith.constant 0 : i32
    %c0_i32_0 = arith.constant 0 : i32
    %c0_i32_1 = arith.constant 0 : i32
    return %c0_i32, %c0_i32_0 : i32, i32
  }
  func.func @transform_6(%arg0: i32, %arg1: i32) -> (i32, i32) {
    %c0_i32 = arith.constant 0 : i32
    %c0_i32_0 = arith.constant 0 : i32
    %c0_i32_1 = arith.constant 0 : i32
    return %c0_i32, %c0_i32_0 : i32, i32
  }
  func.func @transform_7(%arg0: i32, %arg1: i32) -> (i32, i32) {
    %c0_i32 = arith.constant 0 : i32
    return %arg0, %arg1 : i32, i32
  }
  func.func @transform_8(%arg0: i32, %arg1: i32) -> (i32, i32) {
    %c0_i32 = arith.constant 0 : i32
    %c0_i32_0 = arith.constant 0 : i32
    return %arg0, %c0_i32 : i32, i32
  }
}

</mosaic_0001>

<llo_original>
// kernel: meta_learner_forward.1
$region0: #{meta_learner_forward.1}
  #allocation0 [shape = 'u32[]', space=smem, size = 0x4, offset = 0x4, fixed_abs, tag = 'smem constant byte address 0x4 - core index']
  #allocation1 [shape = 'u32[144,128]{1,0:T(1,128)}', space=vmem, size = 0x12000, scoped, tag = 'internal scratch']
  #allocation2 [shape = 'f32[64,1]{1,0:T(8,128)}', space=vmem, size = 0x8000, scoped, tag = 'scratch operand']
  #allocation3 [shape = 'f32[64,1]{1,0:T(8,128)}', space=vmem, size = 0x8000, scoped, tag = 'scratch operand']
  %s0 = inlined_call_operand.vmem [shape: f32[64,4], index: 0, kind: input, shape index: {}]
  %s1 = inlined_call_operand.vmem [shape: f32[1,64], index: 1, kind: input, shape index: {}]
  %s2 = inlined_call_operand.vmem [shape: f32[64,1], index: 2, kind: input, shape index: {}]
  %s3 = inlined_call_operand.vmem [shape: f32[4,384], index: 3, kind: input, shape index: {}]
  %s4 = inlined_call_operand.vmem [shape: f32[1,384], index: 4, kind: input, shape index: {}]
  %s5 = inlined_call_operand.vmem [shape: f32[128,128], index: 5, kind: input, shape index: {}]
  %s6 = inlined_call_operand.vmem [shape: f32[2,128], index: 6, kind: input, shape index: {}]
  %s7 = inlined_call_operand.vmem [shape: f32[64,64], index: 7, kind: output, shape index: {0}]
  %s8 = inlined_call_operand.vmem [shape: f32[64,384], index: 8, kind: output, shape index: {1}]
  %9 = xla_tuple %s7, %s8
  %s10 = sld [smem:[#allocation0]]
  $region50: #{meta_learner_forward.1} parent=0
    _
  %s12 = ssub.s32 1, %s10
  %s13 = scalar_select 0, %s12, %s10
  // Predicated region
  $region2: #{meta_learner_forward.1} parent=0 // pred_check
    _
  $region3: #{meta_learner_forward.1} parent=0 // pred_check_branch
    %15 = sbr.rel (0) target = $region5
  $region4: #{meta_learner_forward.1} parent=0 // pred_region
    _
  $region5: #{meta_learner_forward.1} parent=0 // pred_fallthru
    _
  // Predicated region
  $region6: #{meta_learner_forward.1} parent=0 // pred_check
    _
  $region7: #{meta_learner_forward.1} parent=0 // pred_check_branch
    %17 = sbr.rel (0) target = $region9
  $region8: #{meta_learner_forward.1} parent=0 // pred_region
    _
  $region9: #{meta_learner_forward.1} parent=0 // pred_fallthru
    _
  // Predicated region
  $region10: #{meta_learner_forward.1} parent=0 // pred_check
    _
  $region11: #{meta_learner_forward.1} parent=0 // pred_check_branch
    %19 = sbr.rel (0) target = $region13
  $region12: #{meta_learner_forward.1} parent=0 // pred_region
    _
  $region13: #{meta_learner_forward.1} parent=0 // pred_fallthru
    _
  // Predicated region
  $region14: #{meta_learner_forward.1} parent=0 // pred_check
    _
  $region15: #{meta_learner_forward.1} parent=0 // pred_check_branch
    %21 = sbr.rel (0) target = $region17
  $region16: #{meta_learner_forward.1} parent=0 // pred_region
    _
  $region17: #{meta_learner_forward.1} parent=0 // pred_fallthru
    _
  // Predicated region
  $region18: #{meta_learner_forward.1} parent=0 // pred_check
    _
  $region19: #{meta_learner_forward.1} parent=0 // pred_check_branch
    %23 = sbr.rel (0) target = $region21
  $region20: #{meta_learner_forward.1} parent=0 // pred_region
    _
  $region21: #{meta_learner_forward.1} parent=0 // pred_fallthru
    _
  // Predicated region
  $region22: #{meta_learner_forward.1} parent=0 // pred_check
    _
  $region23: #{meta_learner_forward.1} parent=0 // pred_check_branch
    %25 = sbr.rel (0) target = $region25
  $region24: #{meta_learner_forward.1} parent=0 // pred_region
    _
  $region25: #{meta_learner_forward.1} parent=0 // pred_fallthru
    _
  // Predicated region
  $region26: #{meta_learner_forward.1} parent=0 // pred_check
    _
  $region27: #{meta_learner_forward.1} parent=0 // pred_check_branch
    %27 = sbr.rel (0) target = $region29
  $region28: #{meta_learner_forward.1} parent=0 // pred_region
    _
  $region29: #{meta_learner_forward.1} parent=0 // pred_fallthru
    _
  %p28 = scmp.eq.s32.totalorder 0, 0
  // Predicated region
  $region30: #{meta_learner_forward.1} parent=0 // pred_check
    %p29 = pneg %p28
  $region31: #{meta_learner_forward.1} parent=0 // pred_check_branch
    %31 = sbr.rel (%p29) target = $region33
  $region32: #{meta_learner_forward.1} parent=0 // pred_region
    %v32 = vld [vmem:[%s0] sm:$0xff]
    %v33 = vld [vmem:[%s0 + $0x8] sm:$0xff]
    %v34 = vld [vmem:[%s0 + $0x10] sm:$0xff]
    %v35 = vld [vmem:[%s0 + $0x18] sm:$0xff]
    %v36 = vld [vmem:[%s0 + $0x20] sm:$0xff]
    %v37 = vld [vmem:[%s0 + $0x28] sm:$0xff]
    %v38 = vld [vmem:[%s0 + $0x30] sm:$0xff]
    %v39 = vld [vmem:[%s0 + $0x38] sm:$0xff]
    %v40 = vld [vmem:[%s3] sm:$0xff]
    %v41 = vld [vmem:[%s3 + $0x8] sm:$0xf]
    %v42 = vld [vmem:[%s4] sm:$0x7]
    %44 = vset.pattern.permute.xlu0 0
    %45 = vperm.xlu0 %44, %v32
    %v46 = vpop.permute.xlu0 %45
    %49 = vset.pattern.permute.xlu0 0
    %50 = vperm.xlu0 %49, %v33
    %v51 = vpop.permute.xlu0 %50
    %54 = vset.pattern.permute.xlu0 0
    %55 = vperm.xlu0 %54, %v34
    %v56 = vpop.permute.xlu0 %55
    %59 = vset.pattern.permute.xlu0 0
    %60 = vperm.xlu0 %59, %v35
    %v61 = vpop.permute.xlu0 %60
    %64 = vset.pattern.permute.xlu0 0
    %65 = vperm.xlu0 %64, %v36
    %v66 = vpop.permute.xlu0 %65
    %69 = vset.pattern.permute.xlu0 0
    %70 = vperm.xlu0 %69, %v37
    %v71 = vpop.permute.xlu0 %70
    %74 = vset.pattern.permute.xlu0 0
    %75 = vperm.xlu0 %74, %v38
    %v76 = vpop.permute.xlu0 %75
    %79 = vset.pattern.permute.xlu0 0
    %80 = vperm.xlu0 %79, %v39
    %v81 = vpop.permute.xlu0 %80
    %v85 = vlaneseq
    %v86 = vshrl.u32 %v85, 7
    %v87 = vsub.s32 0, %v86
    %v88 = vrot.slane %v40, %v87
    %v89 = vlaneseq
    %v90 = vshrl.u32 %v89, 7
    %v91 = vsub.s32 4, %v90
    %v92 = vrot.slane %v40, %v91
    %v93 = vlaneseq
    %v94 = vshrl.u32 %v93, 7
    %v95 = vsub.s32 0, %v94
    %v96 = vrot.slane %v41, %v95
    %v100 = vlaneseq
    %v101 = vshrl.u32 %v100, 7
    %v102 = vsub.s32 0, %v101
    %v103 = vrot.slane %v88, %v102
    %v104 = vlaneseq
    %v105 = vshrl.u32 %v104, 7
    %v106 = vsub.s32 0, %v105
    %v107 = vrot.slane %v92, %v106
    %v108 = vlaneseq
    %v109 = vshrl.u32 %v108, 7
    %v110 = vsub.s32 0, %v109
    %v111 = vrot.slane %v96, %v110
    %v112 = vmul.f32 %v46, %v103
    %v113 = vmul.f32 %v46, %v107
    %v114 = vmul.f32 %v46, %v111
    %v115 = vmul.f32 %v51, %v103
    %v116 = vmul.f32 %v51, %v107
    %v117 = vmul.f32 %v51, %v111
    %v118 = vmul.f32 %v56, %v103
    %v119 = vmul.f32 %v56, %v107
    %v120 = vmul.f32 %v56, %v111
    %v121 = vmul.f32 %v61, %v103
    %v122 = vmul.f32 %v61, %v107
    %v123 = vmul.f32 %v61, %v111
    %v124 = vmul.f32 %v66, %v103
    %v125 = vmul.f32 %v66, %v107
    %v126 = vmul.f32 %v66, %v111
    %v127 = vmul.f32 %v71, %v103
    %v128 = vmul.f32 %v71, %v107
    %v129 = vmul.f32 %v71, %v111
    %v130 = vmul.f32 %v76, %v103
    %v131 = vmul.f32 %v76, %v107
    %v132 = vmul.f32 %v76, %v111
    %v133 = vmul.f32 %v81, %v103
    %v134 = vmul.f32 %v81, %v107
    %v135 = vmul.f32 %v81, %v111
    %v137 = vlaneseq
    %v138 = vshrl.u32 %v137, 7
    %v139 = vsub.s32 0, %v138
    %v140 = vrot.slane %v42, %v139
    %v141 = vlaneseq
    %v142 = vshrl.u32 %v141, 7
    %v143 = vsub.s32 1, %v142
    %v144 = vrot.slane %v42, %v143
    %v145 = vlaneseq
    %v146 = vshrl.u32 %v145, 7
    %v147 = vsub.s32 2, %v146
    %v148 = vrot.slane %v42, %v147
    %v152 = vadd.f32 %v140, %v112
    %v153 = vadd.f32 %v144, %v113
    %v154 = vadd.f32 %v148, %v114
    %v155 = vadd.f32 %v140, %v115
    %v156 = vadd.f32 %v144, %v116
    %v157 = vadd.f32 %v148, %v117
    %v158 = vadd.f32 %v140, %v118
    %v159 = vadd.f32 %v144, %v119
    %v160 = vadd.f32 %v148, %v120
    %v161 = vadd.f32 %v140, %v121
    %v162 = vadd.f32 %v144, %v122
    %v163 = vadd.f32 %v148, %v123
    %v164 = vadd.f32 %v140, %v124
    %v165 = vadd.f32 %v144, %v125
    %v166 = vadd.f32 %v148, %v126
    %v167 = vadd.f32 %v140, %v127
    %v168 = vadd.f32 %v144, %v128
    %v169 = vadd.f32 %v148, %v129
    %v170 = vadd.f32 %v140, %v130
    %v171 = vadd.f32 %v144, %v131
    %v172 = vadd.f32 %v148, %v132
    %v173 = vadd.f32 %v140, %v133
    %v174 = vadd.f32 %v144, %v134
    %v175 = vadd.f32 %v148, %v135
    %176 = vset.pattern.permute.xlu0 1
    %177 = vperm.xlu0 %176, %v32
    %v178 = vpop.permute.xlu0 %177
    %180 = vset.pattern.permute.xlu0 1
    %181 = vperm.xlu0 %180, %v33
    %v182 = vpop.permute.xlu0 %181
    %184 = vset.pattern.permute.xlu0 1
    %185 = vperm.xlu0 %184, %v34
    %v186 = vpop.permute.xlu0 %185
    %188 = vset.pattern.permute.xlu0 1
    %189 = vperm.xlu0 %188, %v35
    %v190 = vpop.permute.xlu0 %189
    %192 = vset.pattern.permute.xlu0 1
    %193 = vperm.xlu0 %192, %v36
    %v194 = vpop.permute.xlu0 %193
    %196 = vset.pattern.permute.xlu0 1
    %197 = vperm.xlu0 %196, %v37
    %v198 = vpop.permute.xlu0 %197
    %200 = vset.pattern.permute.xlu0 1
    %201 = vperm.xlu0 %200, %v38
    %v202 = vpop.permute.xlu0 %201
    %204 = vset.pattern.permute.xlu0 1
    %205 = vperm.xlu0 %204, %v39
    %v206 = vpop.permute.xlu0 %205
    %v208 = vlaneseq
    %v209 = vshrl.u32 %v208, 7
    %v210 = vsub.s32 1, %v209
    %v211 = vrot.slane %v40, %v210
    %v212 = vlaneseq
    %v213 = vshrl.u32 %v212, 7
    %v214 = vsub.s32 5, %v213
    %v215 = vrot.slane %v40, %v214
    %v216 = vlaneseq
    %v217 = vshrl.u32 %v216, 7
    %v218 = vsub.s32 1, %v217
    %v219 = vrot.slane %v41, %v218
    %v223 = vlaneseq
    %v224 = vshrl.u32 %v223, 7
    %v225 = vsub.s32 1, %v224
    %v226 = vrot.slane %v211, %v225
    %v227 = vlaneseq
    %v228 = vshrl.u32 %v227, 7
    %v229 = vsub.s32 1, %v228
    %v230 = vrot.slane %v215, %v229
    %v231 = vlaneseq
    %v232 = vshrl.u32 %v231, 7
    %v233 = vsub.s32 1, %v232
    %v234 = vrot.slane %v219, %v233
    %v235 = vmul.f32 %v178, %v226
    %v236 = vmul.f32 %v178, %v230
    %v237 = vmul.f32 %v178, %v234
    %v238 = vmul.f32 %v182, %v226
    %v239 = vmul.f32 %v182, %v230
    %v240 = vmul.f32 %v182, %v234
    %v241 = vmul.f32 %v186, %v226
    %v242 = vmul.f32 %v186, %v230
    %v243 = vmul.f32 %v186, %v234
    %v244 = vmul.f32 %v190, %v226
    %v245 = vmul.f32 %v190, %v230
    %v246 = vmul.f32 %v190, %v234
    %v247 = vmul.f32 %v194, %v226
    %v248 = vmul.f32 %v194, %v230
    %v249 = vmul.f32 %v194, %v234
    %v250 = vmul.f32 %v198, %v226
    %v251 = vmul.f32 %v198, %v230
    %v252 = vmul.f32 %v198, %v234
    %v253 = vmul.f32 %v202, %v226
    %v254 = vmul.f32 %v202, %v230
    %v255 = vmul.f32 %v202, %v234
    %v256 = vmul.f32 %v206, %v226
    %v257 = vmul.f32 %v206, %v230
    %v258 = vmul.f32 %v206, %v234
    %v259 = vadd.f32 %v152, %v235
    %v260 = vadd.f32 %v153, %v236
    %v261 = vadd.f32 %v154, %v237
    %v262 = vadd.f32 %v155, %v238
    %v263 = vadd.f32 %v156, %v239
    %v264 = vadd.f32 %v157, %v240
    %v265 = vadd.f32 %v158, %v241
    %v266 = vadd.f32 %v159, %v242
    %v267 = vadd.f32 %v160, %v243
    %v268 = vadd.f32 %v161, %v244
    %v269 = vadd.f32 %v162, %v245
    %v270 = vadd.f32 %v163, %v246
    %v271 = vadd.f32 %v164, %v247
    %v272 = vadd.f32 %v165, %v248
    %v273 = vadd.f32 %v166, %v249
    %v274 = vadd.f32 %v167, %v250
    %v275 = vadd.f32 %v168, %v251
    %v276 = vadd.f32 %v169, %v252
    %v277 = vadd.f32 %v170, %v253
    %v278 = vadd.f32 %v171, %v254
    %v279 = vadd.f32 %v172, %v255
    %v280 = vadd.f32 %v173, %v256
    %v281 = vadd.f32 %v174, %v257
    %v282 = vadd.f32 %v175, %v258
    %283 = vset.pattern.permute.xlu0 2
    %284 = vperm.xlu0 %283, %v32
    %v285 = vpop.permute.xlu0 %284
    %287 = vset.pattern.permute.xlu0 2
    %288 = vperm.xlu0 %287, %v33
    %v289 = vpop.permute.xlu0 %288
    %291 = vset.pattern.permute.xlu0 2
    %292 = vperm.xlu0 %291, %v34
    %v293 = vpop.permute.xlu0 %292
    %295 = vset.pattern.permute.xlu0 2
    %296 = vperm.xlu0 %295, %v35
    %v297 = vpop.permute.xlu0 %296
    %299 = vset.pattern.permute.xlu0 2
    %300 = vperm.xlu0 %299, %v36
    %v301 = vpop.permute.xlu0 %300
    %303 = vset.pattern.permute.xlu0 2
    %304 = vperm.xlu0 %303, %v37
    %v305 = vpop.permute.xlu0 %304
    %307 = vset.pattern.permute.xlu0 2
    %308 = vperm.xlu0 %307, %v38
    %v309 = vpop.permute.xlu0 %308
    %311 = vset.pattern.permute.xlu0 2
    %312 = vperm.xlu0 %311, %v39
    %v313 = vpop.permute.xlu0 %312
    %v315 = vlaneseq
    %v316 = vshrl.u32 %v315, 7
    %v317 = vsub.s32 2, %v316
    %v318 = vrot.slane %v40, %v317
    %v319 = vlaneseq
    %v320 = vshrl.u32 %v319, 7
    %v321 = vsub.s32 6, %v320
    %v322 = vrot.slane %v40, %v321
    %v323 = vlaneseq
    %v324 = vshrl.u32 %v323, 7
    %v325 = vsub.s32 2, %v324
    %v326 = vrot.slane %v41, %v325
    %v330 = vlaneseq
    %v331 = vshrl.u32 %v330, 7
    %v332 = vsub.s32 2, %v331
    %v333 = vrot.slane %v318, %v332
    %v334 = vlaneseq
    %v335 = vshrl.u32 %v334, 7
    %v336 = vsub.s32 2, %v335
    %v337 = vrot.slane %v322, %v336
    %v338 = vlaneseq
    %v339 = vshrl.u32 %v338, 7
    %v340 = vsub.s32 2, %v339
    %v341 = vrot.slane %v326, %v340
    %v342 = vmul.f32 %v285, %v333
    %v343 = vmul.f32 %v285, %v337
    %v344 = vmul.f32 %v285, %v341
    %v345 = vmul.f32 %v289, %v333
    %v346 = vmul.f32 %v289, %v337
    %v347 = vmul.f32 %v289, %v341
    %v348 = vmul.f32 %v293, %v333
    %v349 = vmul.f32 %v293, %v337
    %v350 = vmul.f32 %v293, %v341
    %v351 = vmul.f32 %v297, %v333
    %v352 = vmul.f32 %v297, %v337
    %v353 = vmul.f32 %v297, %v341
    %v354 = vmul.f32 %v301, %v333
    %v355 = vmul.f32 %v301, %v337
    %v356 = vmul.f32 %v301, %v341
    %v357 = vmul.f32 %v305, %v333
    %v358 = vmul.f32 %v305, %v337
    %v359 = vmul.f32 %v305, %v341
    %v360 = vmul.f32 %v309, %v333
    %v361 = vmul.f32 %v309, %v337
    %v362 = vmul.f32 %v309, %v341
    %v363 = vmul.f32 %v313, %v333
    %v364 = vmul.f32 %v313, %v337
    %v365 = vmul.f32 %v313, %v341
    %v366 = vadd.f32 %v259, %v342
    %v367 = vadd.f32 %v260, %v343
    %v368 = vadd.f32 %v261, %v344
    %v369 = vadd.f32 %v262, %v345
    %v370 = vadd.f32 %v263, %v346
    %v371 = vadd.f32 %v264, %v347
    %v372 = vadd.f32 %v265, %v348
    %v373 = vadd.f32 %v266, %v349
    %v374 = vadd.f32 %v267, %v350
    %v375 = vadd.f32 %v268, %v351
    %v376 = vadd.f32 %v269, %v352
    %v377 = vadd.f32 %v270, %v353
    %v378 = vadd.f32 %v271, %v354
    %v379 = vadd.f32 %v272, %v355
    %v380 = vadd.f32 %v273, %v356
    %v381 = vadd.f32 %v274, %v357
    %v382 = vadd.f32 %v275, %v358
    %v383 = vadd.f32 %v276, %v359
    %v384 = vadd.f32 %v277, %v360
    %v385 = vadd.f32 %v278, %v361
    %v386 = vadd.f32 %v279, %v362
    %v387 = vadd.f32 %v280, %v363
    %v388 = vadd.f32 %v281, %v364
    %v389 = vadd.f32 %v282, %v365
    %390 = vset.pattern.permute.xlu0 3
    %391 = vperm.xlu0 %390, %v32
    %v392 = vpop.permute.xlu0 %391
    %394 = vset.pattern.permute.xlu0 3
    %395 = vperm.xlu0 %394, %v33
    %v396 = vpop.permute.xlu0 %395
    %398 = vset.pattern.permute.xlu0 3
    %399 = vperm.xlu0 %398, %v34
    %v400 = vpop.permute.xlu0 %399
    %402 = vset.pattern.permute.xlu0 3
    %403 = vperm.xlu0 %402, %v35
    %v404 = vpop.permute.xlu0 %403
    %406 = vset.pattern.permute.xlu0 3
    %407 = vperm.xlu0 %406, %v36
    %v408 = vpop.permute.xlu0 %407
    %410 = vset.pattern.permute.xlu0 3
    %411 = vperm.xlu0 %410, %v37
    %v412 = vpop.permute.xlu0 %411
    %414 = vset.pattern.permute.xlu0 3
    %415 = vperm.xlu0 %414, %v38
    %v416 = vpop.permute.xlu0 %415
    %418 = vset.pattern.permute.xlu0 3
    %419 = vperm.xlu0 %418, %v39
    %v420 = vpop.permute.xlu0 %419
    %v422 = vlaneseq
    %v423 = vshrl.u32 %v422, 7
    %v424 = vsub.s32 3, %v423
    %v425 = vrot.slane %v40, %v424
    %v426 = vlaneseq
    %v427 = vshrl.u32 %v426, 7
    %v428 = vsub.s32 7, %v427
    %v429 = vrot.slane %v40, %v428
    %v430 = vlaneseq
    %v431 = vshrl.u32 %v430, 7
    %v432 = vsub.s32 3, %v431
    %v433 = vrot.slane %v41, %v432
    %v437 = vlaneseq
    %v438 = vshrl.u32 %v437, 7
    %v439 = vsub.s32 3, %v438
    %v440 = vrot.slane %v425, %v439
    %v441 = vlaneseq
    %v442 = vshrl.u32 %v441, 7
    %v443 = vsub.s32 3, %v442
    %v444 = vrot.slane %v429, %v443
    %v445 = vlaneseq
    %v446 = vshrl.u32 %v445, 7
    %v447 = vsub.s32 3, %v446
    %v448 = vrot.slane %v433, %v447
    %v449 = vmul.f32 %v392, %v440
    %v450 = vmul.f32 %v392, %v444
    %v451 = vmul.f32 %v392, %v448
    %v452 = vmul.f32 %v396, %v440
    %v453 = vmul.f32 %v396, %v444
    %v454 = vmul.f32 %v396, %v448
    %v455 = vmul.f32 %v400, %v440
    %v456 = vmul.f32 %v400, %v444
    %v457 = vmul.f32 %v400, %v448
    %v458 = vmul.f32 %v404, %v440
    %v459 = vmul.f32 %v404, %v444
    %v460 = vmul.f32 %v404, %v448
    %v461 = vmul.f32 %v408, %v440
    %v462 = vmul.f32 %v408, %v444
    %v463 = vmul.f32 %v408, %v448
    %v464 = vmul.f32 %v412, %v440
    %v465 = vmul.f32 %v412, %v444
    %v466 = vmul.f32 %v412, %v448
    %v467 = vmul.f32 %v416, %v440
    %v468 = vmul.f32 %v416, %v444
    %v469 = vmul.f32 %v416, %v448
    %v470 = vmul.f32 %v420, %v440
    %v471 = vmul.f32 %v420, %v444
    %v472 = vmul.f32 %v420, %v448
    %v473 = vadd.f32 %v366, %v449
    %v474 = vadd.f32 %v367, %v450
    %v475 = vadd.f32 %v368, %v451
    %v476 = vadd.f32 %v369, %v452
    %v477 = vadd.f32 %v370, %v453
    %v478 = vadd.f32 %v371, %v454
    %v479 = vadd.f32 %v372, %v455
    %v480 = vadd.f32 %v373, %v456
    %v481 = vadd.f32 %v374, %v457
    %v482 = vadd.f32 %v375, %v458
    %v483 = vadd.f32 %v376, %v459
    %v484 = vadd.f32 %v377, %v460
    %v485 = vadd.f32 %v378, %v461
    %v486 = vadd.f32 %v379, %v462
    %v487 = vadd.f32 %v380, %v463
    %v488 = vadd.f32 %v381, %v464
    %v489 = vadd.f32 %v382, %v465
    %v490 = vadd.f32 %v383, %v466
    %v491 = vadd.f32 %v384, %v467
    %v492 = vadd.f32 %v385, %v468
    %v493 = vadd.f32 %v386, %v469
    %v494 = vadd.f32 %v387, %v470
    %v495 = vadd.f32 %v388, %v471
    %v496 = vadd.f32 %v389, %v472
    %v497 = vxor.u32 %v473, 2147483648
    %v498 = vxor.u32 %v476, 2147483648
    %v499 = vxor.u32 %v479, 2147483648
    %v500 = vxor.u32 %v482, 2147483648
    %v501 = vxor.u32 %v485, 2147483648
    %v502 = vxor.u32 %v488, 2147483648
    %v503 = vxor.u32 %v491, 2147483648
    %v504 = vxor.u32 %v494, 2147483648
    %v505 = vmul.f32 %v497, 1.442695
    %v506 = vpow.pop %v505
    %v507 = vmul.f32 %v498, 1.442695
    %v508 = vpow.pop %v507
    %v509 = vmul.f32 %v499, 1.442695
    %v510 = vpow.pop %v509
    %v511 = vmul.f32 %v500, 1.442695
    %v512 = vpow.pop %v511
    %v513 = vmul.f32 %v501, 1.442695
    %v514 = vpow.pop %v513
    %v515 = vmul.f32 %v502, 1.442695
    %v516 = vpow.pop %v515
    %v517 = vmul.f32 %v503, 1.442695
    %v518 = vpow.pop %v517
    %v519 = vmul.f32 %v504, 1.442695
    %v520 = vpow.pop %v519
    %v521 = vadd.f32 %v506, 1.0
    %v522 = vadd.f32 %v508, 1.0
    %v523 = vadd.f32 %v510, 1.0
    %v524 = vadd.f32 %v512, 1.0
    %v525 = vadd.f32 %v514, 1.0
    %v526 = vadd.f32 %v516, 1.0
    %v527 = vadd.f32 %v518, 1.0
    %v528 = vadd.f32 %v520, 1.0
    %v529 = vrcp.pop %v521
    %v530 = vmul.f32 1.0, %v529
    %v531 = vrcp.pop %v522
    %v532 = vmul.f32 1.0, %v531
    %v533 = vrcp.pop %v523
    %v534 = vmul.f32 1.0, %v533
    %v535 = vrcp.pop %v524
    %v536 = vmul.f32 1.0, %v535
    %v537 = vrcp.pop %v525
    %v538 = vmul.f32 1.0, %v537
    %v539 = vrcp.pop %v526
    %v540 = vmul.f32 1.0, %v539
    %v541 = vrcp.pop %v527
    %v542 = vmul.f32 1.0, %v541
    %v543 = vrcp.pop %v528
    %v544 = vmul.f32 1.0, %v543
    %v545 = vtanh.pop %v474
    %v546 = vtanh.pop %v477
    %v547 = vtanh.pop %v480
    %v548 = vtanh.pop %v483
    %v549 = vtanh.pop %v486
    %v550 = vtanh.pop %v489
    %v551 = vtanh.pop %v492
    %v552 = vtanh.pop %v495
    %v553 = vxor.u32 %v475, 2147483648
    %v554 = vxor.u32 %v478, 2147483648
    %v555 = vxor.u32 %v481, 2147483648
    %v556 = vxor.u32 %v484, 2147483648
    %v557 = vxor.u32 %v487, 2147483648
    %v558 = vxor.u32 %v490, 2147483648
    %v559 = vxor.u32 %v493, 2147483648
    %v560 = vxor.u32 %v496, 2147483648
    %v561 = vmul.f32 %v553, 1.442695
    %v562 = vpow.pop %v561
    %v563 = vmul.f32 %v554, 1.442695
    %v564 = vpow.pop %v563
    %v565 = vmul.f32 %v555, 1.442695
    %v566 = vpow.pop %v565
    %v567 = vmul.f32 %v556, 1.442695
    %v568 = vpow.pop %v567
    %v569 = vmul.f32 %v557, 1.442695
    %v570 = vpow.pop %v569
    %v571 = vmul.f32 %v558, 1.442695
    %v572 = vpow.pop %v571
    %v573 = vmul.f32 %v559, 1.442695
    %v574 = vpow.pop %v573
    %v575 = vmul.f32 %v560, 1.442695
    %v576 = vpow.pop %v575
    %v577 = vadd.f32 %v562, 1.0
    %v578 = vadd.f32 %v564, 1.0
    %v579 = vadd.f32 %v566, 1.0
    %v580 = vadd.f32 %v568, 1.0
    %v581 = vadd.f32 %v570, 1.0
    %v582 = vadd.f32 %v572, 1.0
    %v583 = vadd.f32 %v574, 1.0
    %v584 = vadd.f32 %v576, 1.0
    %v585 = vrcp.pop %v577
    %v586 = vmul.f32 1.0, %v585
    %v587 = vrcp.pop %v578
    %v588 = vmul.f32 1.0, %v587
    %v589 = vrcp.pop %v579
    %v590 = vmul.f32 1.0, %v589
    %v591 = vrcp.pop %v580
    %v592 = vmul.f32 1.0, %v591
    %v593 = vrcp.pop %v581
    %v594 = vmul.f32 1.0, %v593
    %v595 = vrcp.pop %v582
    %v596 = vmul.f32 1.0, %v595
    %v597 = vrcp.pop %v583
    %v598 = vmul.f32 1.0, %v597
    %v599 = vrcp.pop %v584
    %v600 = vmul.f32 1.0, %v599
    %v601 = vmul.f32 %v530, %v545
    %v602 = vmul.f32 %v532, %v546
    %v603 = vmul.f32 %v534, %v547
    %v604 = vmul.f32 %v536, %v548
    %v605 = vmul.f32 %v538, %v549
    %v606 = vmul.f32 %v540, %v550
    %v607 = vmul.f32 %v542, %v551
    %v608 = vmul.f32 %v544, %v552
    %v609 = vtanh.pop %v601
    %v610 = vtanh.pop %v602
    %v611 = vtanh.pop %v603
    %v612 = vtanh.pop %v604
    %v613 = vtanh.pop %v605
    %v614 = vtanh.pop %v606
    %v615 = vtanh.pop %v607
    %v616 = vtanh.pop %v608
    %v617 = vmul.f32 %v586, %v609
    %v618 = vmul.f32 %v588, %v610
    %v619 = vmul.f32 %v590, %v611
    %v620 = vmul.f32 %v592, %v612
    %v621 = vmul.f32 %v594, %v613
    %v622 = vmul.f32 %v596, %v614
    %v623 = vmul.f32 %v598, %v615
    %v624 = vmul.f32 %v600, %v616
    %v625 = vld [vmem:[%s2] sm:$0xff]
    %v626 = vld [vmem:[%s2 + $0x8] sm:$0xff]
    %v627 = vld [vmem:[%s2 + $0x10] sm:$0xff]
    %v628 = vld [vmem:[%s2 + $0x18] sm:$0xff]
    %v629 = vld [vmem:[%s2 + $0x20] sm:$0xff]
    %v630 = vld [vmem:[%s2 + $0x28] sm:$0xff]
    %v631 = vld [vmem:[%s2 + $0x30] sm:$0xff]
    %v632 = vld [vmem:[%s2 + $0x38] sm:$0xff]
    %v633 = vld [vmem:[%s6] sm:$0x3]
    %v634 = vld [vmem:[%s5] sm:$0xff]
    %v635 = vld [vmem:[%s5 + $0x8] sm:$0xff]
    %v636 = vld [vmem:[%s5 + $0x10] sm:$0xff]
    %v637 = vld [vmem:[%s5 + $0x18] sm:$0xff]
    %v638 = vld [vmem:[%s5 + $0x20] sm:$0xff]
    %v639 = vld [vmem:[%s5 + $0x28] sm:$0xff]
    %v640 = vld [vmem:[%s5 + $0x30] sm:$0xff]
    %v641 = vld [vmem:[%s5 + $0x38] sm:$0xff]
    %v642 = vld [vmem:[%s5 + $0x40] sm:$0xff]
    %v643 = vld [vmem:[%s5 + $0x48] sm:$0xff]
    %v644 = vld [vmem:[%s5 + $0x50] sm:$0xff]
    %v645 = vld [vmem:[%s5 + $0x58] sm:$0xff]
    %v646 = vld [vmem:[%s5 + $0x60] sm:$0xff]
    %v647 = vld [vmem:[%s5 + $0x68] sm:$0xff]
    %v648 = vld [vmem:[%s5 + $0x70] sm:$0xff]
    %v649 = vld [vmem:[%s5 + $0x78] sm:$0xff]
    %651 = vset.pattern.permute.xlu0 0
    %652 = vperm.xlu0 %651, %v625
    %v653 = vpop.permute.xlu0 %652
    %656 = vset.pattern.permute.xlu0 0
    %657 = vperm.xlu0 %656, %v626
    %v658 = vpop.permute.xlu0 %657
    %661 = vset.pattern.permute.xlu0 0
    %662 = vperm.xlu0 %661, %v627
    %v663 = vpop.permute.xlu0 %662
    %666 = vset.pattern.permute.xlu0 0
    %667 = vperm.xlu0 %666, %v628
    %v668 = vpop.permute.xlu0 %667
    %671 = vset.pattern.permute.xlu0 0
    %672 = vperm.xlu0 %671, %v629
    %v673 = vpop.permute.xlu0 %672
    %676 = vset.pattern.permute.xlu0 0
    %677 = vperm.xlu0 %676, %v630
    %v678 = vpop.permute.xlu0 %677
    %681 = vset.pattern.permute.xlu0 0
    %682 = vperm.xlu0 %681, %v631
    %v683 = vpop.permute.xlu0 %682
    %686 = vset.pattern.permute.xlu0 0
    %687 = vperm.xlu0 %686, %v632
    %v688 = vpop.permute.xlu0 %687
    %v690 = vlaneseq
    %v691 = vshrl.u32 %v690, 7
    %v692 = vsub.s32 0, %v691
    %v693 = vrot.slane %v633, %v692
    %v694 = vmul.f32 %v653, %v693
    %v695 = vmul.f32 %v658, %v693
    %v696 = vmul.f32 %v663, %v693
    %v697 = vmul.f32 %v668, %v693
    %v698 = vmul.f32 %v673, %v693
    %v699 = vmul.f32 %v678, %v693
    %v700 = vmul.f32 %v683, %v693
    %v701 = vmul.f32 %v688, %v693
    %702 = vmatprep.subr.mxu0 0.0
    %703 = vmatpush1.msra.mxu0 %v634
    %704 = vmatprep.subr.mxu0 0.0
    %705 = vmatpush1.msra.mxu0 %v635
    %706 = vmatprep.subr.mxu0 0.0
    %707 = vmatpush1.msra.mxu0 %v636
    %708 = vmatprep.subr.mxu0 0.0
    %709 = vmatpush1.msra.mxu0 %v637
    %710 = vmatprep.subr.mxu0 0.0
    %711 = vmatpush1.msra.mxu0 %v638
    %712 = vmatprep.subr.mxu0 0.0
    %713 = vmatpush1.msra.mxu0 %v639
    %714 = vmatprep.subr.mxu0 0.0
    %715 = vmatpush1.msra.mxu0 %v640
    %716 = vmatprep.subr.mxu0 0.0
    %717 = vmatpush1.msra.mxu0 %v641
    %718 = vmatprep.subr.mxu0 0.0
    %719 = vmatpush1.msra.mxu0 %v642
    %720 = vmatprep.subr.mxu0 0.0
    %721 = vmatpush1.msra.mxu0 %v643
    %722 = vmatprep.subr.mxu0 0.0
    %723 = vmatpush1.msra.mxu0 %v644
    %724 = vmatprep.subr.mxu0 0.0
    %725 = vmatpush1.msra.mxu0 %v645
    %726 = vmatprep.subr.mxu0 0.0
    %727 = vmatpush1.msra.mxu0 %v646
    %728 = vmatprep.subr.mxu0 0.0
    %729 = vmatpush1.msra.mxu0 %v647
    %730 = vmatprep.subr.mxu0 0.0
    %731 = vmatpush1.msra.mxu0 %v648
    %732 = vmatprep.subr.mxu0 0.0
    %733 = vmatpush1.msra.mxu0 %v649
    %734 = vmatprep.subr.mxu0 0.0
    %735 = vmatpush1.msra.mxu0 0.0
    %736 = vmatprep.subr.mxu0 0.0
    %737 = vmatpush1.msra.mxu0 0.0
    %738 = vmatprep.subr.mxu0 0.0
    %739 = vmatpush1.msra.mxu0 0.0
    %740 = vmatprep.subr.mxu0 0.0
    %741 = vmatpush1.msra.mxu0 0.0
    %742 = vmatprep.subr.mxu0 0.0
    %743 = vmatpush1.msra.mxu0 0.0
    %744 = vmatprep.subr.mxu0 0.0
    %745 = vmatpush1.msra.mxu0 0.0
    %746 = vmatprep.subr.mxu0 0.0
    %747 = vmatpush1.msra.mxu0 0.0
    %748 = vmatprep.subr.mxu0 0.0
    %749 = vmatpush1.msra.mxu0 0.0
    %750 = vmatprep.subr.mxu0 0.0
    %751 = vmatpush1.msra.mxu0 0.0
    %752 = vmatprep.subr.mxu0 0.0
    %753 = vmatpush1.msra.mxu0 0.0
    %754 = vmatprep.subr.mxu0 0.0
    %755 = vmatpush1.msra.mxu0 0.0
    %756 = vmatprep.subr.mxu0 0.0
    %757 = vmatpush1.msra.mxu0 0.0
    %758 = vmatprep.subr.mxu0 0.0
    %759 = vmatpush1.msra.mxu0 0.0
    %760 = vmatprep.subr.mxu0 0.0
    %761 = vmatpush1.msra.mxu0 0.0
    %762 = vmatprep.subr.mxu0 0.0
    %763 = vmatpush1.msra.mxu0 0.0
    %764 = vmatprep.subr.mxu0 0.0
    %765 = vmatpush1.msra.mxu0 0.0
    %766 = vmatprep.mubr.f32.mxu0 0.0
    %767 = vmatmul.mubr.f32.gmra.mrb[0].mxu0 %v617
    %v768 = vpop.f32.mrb[0].mxu0
    %v769 = vadd.f32 %v694, %v768
    %v770 = vpop.f32.mrb[0].mxu0
    %771 = vmatprep.mubr.f32.mxu0 0.0
    %772 = vmatmul.mubr.f32.gmra.mrb[0].mxu0 %v618
    %v773 = vpop.f32.mrb[0].mxu0
    %v774 = vadd.f32 %v695, %v773
    %v775 = vpop.f32.mrb[0].mxu0
    %776 = vmatprep.mubr.f32.mxu0 0.0
    %777 = vmatmul.mubr.f32.gmra.mrb[0].mxu0 %v619
    %v778 = vpop.f32.mrb[0].mxu0
    %v779 = vadd.f32 %v696, %v778
    %v780 = vpop.f32.mrb[0].mxu0
    %781 = vmatprep.mubr.f32.mxu0 0.0
    %782 = vmatmul.mubr.f32.gmra.mrb[0].mxu0 %v620
    %v783 = vpop.f32.mrb[0].mxu0
    %v784 = vadd.f32 %v697, %v783
    %v785 = vpop.f32.mrb[0].mxu0
    %786 = vmatprep.mubr.f32.mxu0 0.0
    %787 = vmatmul.mubr.f32.gmra.mrb[0].mxu0 %v621
    %v788 = vpop.f32.mrb[0].mxu0
    %v789 = vadd.f32 %v698, %v788
    %v790 = vpop.f32.mrb[0].mxu0
    %791 = vmatprep.mubr.f32.mxu0 0.0
    %792 = vmatmul.mubr.f32.gmra.mrb[0].mxu0 %v622
    %v793 = vpop.f32.mrb[0].mxu0
    %v794 = vadd.f32 %v699, %v793
    %v795 = vpop.f32.mrb[0].mxu0
    %796 = vmatprep.mubr.f32.mxu0 0.0
    %797 = vmatmul.mubr.f32.gmra.mrb[0].mxu0 %v623
    %v798 = vpop.f32.mrb[0].mxu0
    %v799 = vadd.f32 %v700, %v798
    %v800 = vpop.f32.mrb[0].mxu0
    %801 = vmatprep.mubr.f32.mxu0 0.0
    %802 = vmatmul.mubr.f32.gmra.mrb[0].mxu0 %v624
    %v803 = vpop.f32.mrb[0].mxu0
    %v804 = vadd.f32 %v701, %v803
    %v805 = vpop.f32.mrb[0].mxu0
    %806 = vdwg.mxu0
    %v807 = vlaneseq
    %v808 = vshrl.u32 %v807, 7
    %v809 = vsub.s32 1, %v808
    %v810 = vrot.slane %v633, %v809
    %v811 = vadd.f32 %v769, %v810
    %v812 = vadd.f32 %v774, %v810
    %v813 = vadd.f32 %v779, %v810
    %v814 = vadd.f32 %v784, %v810
    %v815 = vadd.f32 %v789, %v810
    %v816 = vadd.f32 %v794, %v810
    %v817 = vadd.f32 %v799, %v810
    %v818 = vadd.f32 %v804, %v810
    %v819 = vxor.u32 %v811, 2147483648
    %v820 = vxor.u32 %v812, 2147483648
    %v821 = vxor.u32 %v813, 2147483648
    %v822 = vxor.u32 %v814, 2147483648
    %v823 = vxor.u32 %v815, 2147483648
    %v824 = vxor.u32 %v816, 2147483648
    %v825 = vxor.u32 %v817, 2147483648
    %v826 = vxor.u32 %v818, 2147483648
    %v827 = vmul.f32 %v819, 1.442695
    %v828 = vpow.pop %v827
    %v829 = vmul.f32 %v820, 1.442695
    %v830 = vpow.pop %v829
    %v831 = vmul.f32 %v821, 1.442695
    %v832 = vpow.pop %v831
    %v833 = vmul.f32 %v822, 1.442695
    %v834 = vpow.pop %v833
    %v835 = vmul.f32 %v823, 1.442695
    %v836 = vpow.pop %v835
    %v837 = vmul.f32 %v824, 1.442695
    %v838 = vpow.pop %v837
    %v839 = vmul.f32 %v825, 1.442695
    %v840 = vpow.pop %v839
    %v841 = vmul.f32 %v826, 1.442695
    %v842 = vpow.pop %v841
    %v843 = vadd.f32 %v828, 1.0
    %v844 = vadd.f32 %v830, 1.0
    %v845 = vadd.f32 %v832, 1.0
    %v846 = vadd.f32 %v834, 1.0
    %v847 = vadd.f32 %v836, 1.0
    %v848 = vadd.f32 %v838, 1.0
    %v849 = vadd.f32 %v840, 1.0
    %v850 = vadd.f32 %v842, 1.0
    %v851 = vrcp.pop %v843
    %v852 = vmul.f32 1.0, %v851
    %v853 = vrcp.pop %v844
    %v854 = vmul.f32 1.0, %v853
    %v855 = vrcp.pop %v845
    %v856 = vmul.f32 1.0, %v855
    %v857 = vrcp.pop %v846
    %v858 = vmul.f32 1.0, %v857
    %v859 = vrcp.pop %v847
    %v860 = vmul.f32 1.0, %v859
    %v861 = vrcp.pop %v848
    %v862 = vmul.f32 1.0, %v861
    %v863 = vrcp.pop %v849
    %v864 = vmul.f32 1.0, %v863
    %v865 = vrcp.pop %v850
    %v866 = vmul.f32 1.0, %v865
    %v867 = vmul.f32 %v852, %v625
    %v868 = vmul.f32 %v854, %v626
    %v869 = vmul.f32 %v856, %v627
    %v870 = vmul.f32 %v858, %v628
    %v871 = vmul.f32 %v860, %v629
    %v872 = vmul.f32 %v862, %v630
    %v873 = vmul.f32 %v864, %v631
    %v874 = vmul.f32 %v866, %v632
    %vm875 = vcmask 7168
    %876 = vst.msk [vmem:[#allocation2] sm:$0xff] %vm875, %v867
    %877 = vst.msk [vmem:[#allocation2 + $0x8] sm:$0xff] %vm875, %v868
    %878 = vst.msk [vmem:[#allocation2 + $0x10] sm:$0xff] %vm875, %v869
    %879 = vst.msk [vmem:[#allocation2 + $0x18] sm:$0xff] %vm875, %v870
    %880 = vst.msk [vmem:[#allocation2 + $0x20] sm:$0xff] %vm875, %v871
    %881 = vst.msk [vmem:[#allocation2 + $0x28] sm:$0xff] %vm875, %v872
    %882 = vst.msk [vmem:[#allocation2 + $0x30] sm:$0xff] %vm875, %v873
    %883 = vst.msk [vmem:[#allocation2 + $0x38] sm:$0xff] %vm875, %v874
    %892 = vrot.lane.b32.xlu0 %v852, 127
    %v893 = vpop.permute.xlu0 %892
    %894 = vrot.lane.b32.xlu0 %v854, 127
    %v895 = vpop.permute.xlu0 %894
    %896 = vrot.lane.b32.xlu0 %v856, 127
    %v897 = vpop.permute.xlu0 %896
    %898 = vrot.lane.b32.xlu0 %v858, 127
    %v899 = vpop.permute.xlu0 %898
    %900 = vrot.lane.b32.xlu0 %v860, 127
    %v901 = vpop.permute.xlu0 %900
    %902 = vrot.lane.b32.xlu0 %v862, 127
    %v903 = vpop.permute.xlu0 %902
    %904 = vrot.lane.b32.xlu0 %v864, 127
    %v905 = vpop.permute.xlu0 %904
    %906 = vrot.lane.b32.xlu0 %v866, 127
    %v907 = vpop.permute.xlu0 %906
    %916 = vst.msk [vmem:[#allocation3] sm:$0xff] %vm875, %v893
    %917 = vst.msk [vmem:[#allocation3 + $0x8] sm:$0xff] %vm875, %v895
    %918 = vst.msk [vmem:[#allocation3 + $0x10] sm:$0xff] %vm875, %v897
    %919 = vst.msk [vmem:[#allocation3 + $0x18] sm:$0xff] %vm875, %v899
    %920 = vst.msk [vmem:[#allocation3 + $0x20] sm:$0xff] %vm875, %v901
    %921 = vst.msk [vmem:[#allocation3 + $0x28] sm:$0xff] %vm875, %v903
    %922 = vst.msk [vmem:[#allocation3 + $0x30] sm:$0xff] %vm875, %v905
    %923 = vst.msk [vmem:[#allocation3 + $0x38] sm:$0xff] %vm875, %v907
    %924 = vst [vmem:[%s8] sm:$0xff] %v617
    %925 = vst [vmem:[%s8 + $0x8] sm:$0xff] %v601
    %926 = vst [vmem:[%s8 + $0x10] sm:$0xff] %v811
    %927 = vst [vmem:[%s8 + $0x18] sm:$0xff] %v618
    %928 = vst [vmem:[%s8 + $0x20] sm:$0xff] %v602
    %929 = vst [vmem:[%s8 + $0x28] sm:$0xff] %v812
    %930 = vst [vmem:[%s8 + $0x30] sm:$0xff] %v619
    %931 = vst [vmem:[%s8 + $0x38] sm:$0xff] %v603
    %932 = vst [vmem:[%s8 + $0x40] sm:$0xff] %v813
    %933 = vst [vmem:[%s8 + $0x48] sm:$0xff] %v620
    %934 = vst [vmem:[%s8 + $0x50] sm:$0xff] %v604
    %935 = vst [vmem:[%s8 + $0x58] sm:$0xff] %v814
    %936 = vst [vmem:[%s8 + $0x60] sm:$0xff] %v621
    %937 = vst [vmem:[%s8 + $0x68] sm:$0xff] %v605
    %938 = vst [vmem:[%s8 + $0x70] sm:$0xff] %v815
    %939 = vst [vmem:[%s8 + $0x78] sm:$0xff] %v622
    %940 = vst [vmem:[%s8 + $0x80] sm:$0xff] %v606
    %941 = vst [vmem:[%s8 + $0x88] sm:$0xff] %v816
    %942 = vst [vmem:[%s8 + $0x90] sm:$0xff] %v623
    %943 = vst [vmem:[%s8 + $0x98] sm:$0xff] %v607
    %944 = vst [vmem:[%s8 + $0xa0] sm:$0xff] %v817
    %945 = vst [vmem:[%s8 + $0xa8] sm:$0xff] %v624
    %946 = vst [vmem:[%s8 + $0xb0] sm:$0xff] %v608
    %947 = vst [vmem:[%s8 + $0xb8] sm:$0xff] %v818
  $region33: #{meta_learner_forward.1} parent=0 // pred_fallthru
    _
  %v948 = vld [vmem:[#allocation2] sm:$0xff]
  %v949 = vld [vmem:[#allocation2 + $0x8] sm:$0xff]
  %v950 = vld [vmem:[#allocation2 + $0x10] sm:$0xff]
  %v951 = vld [vmem:[#allocation2 + $0x18] sm:$0xff]
  %v952 = vld [vmem:[#allocation2 + $0x20] sm:$0xff]
  %v953 = vld [vmem:[#allocation2 + $0x28] sm:$0xff]
  %v954 = vld [vmem:[#allocation2 + $0x30] sm:$0xff]
  %v955 = vld [vmem:[#allocation2 + $0x38] sm:$0xff]
  %v956 = vld [vmem:[#allocation3] sm:$0xff]
  %v957 = vld [vmem:[#allocation3 + $0x8] sm:$0xff]
  %v958 = vld [vmem:[#allocation3 + $0x10] sm:$0xff]
  %v959 = vld [vmem:[#allocation3 + $0x18] sm:$0xff]
  %v960 = vld [vmem:[#allocation3 + $0x20] sm:$0xff]
  %v961 = vld [vmem:[#allocation3 + $0x28] sm:$0xff]
  %v962 = vld [vmem:[#allocation3 + $0x30] sm:$0xff]
  %v963 = vld [vmem:[#allocation3 + $0x38] sm:$0xff]
  %v964 = vld [vmem:[%s1] sm:$0x1]
  %966 = vset.pattern.permute.xlu0 0
  %967 = vperm.xlu0 %966, %v956
  %v968 = vpop.permute.xlu0 %967
  %971 = vset.pattern.permute.xlu0 0
  %972 = vperm.xlu0 %971, %v957
  %v973 = vpop.permute.xlu0 %972
  %976 = vset.pattern.permute.xlu0 0
  %977 = vperm.xlu0 %976, %v958
  %v978 = vpop.permute.xlu0 %977
  %981 = vset.pattern.permute.xlu0 0
  %982 = vperm.xlu0 %981, %v959
  %v983 = vpop.permute.xlu0 %982
  %986 = vset.pattern.permute.xlu0 0
  %987 = vperm.xlu0 %986, %v960
  %v988 = vpop.permute.xlu0 %987
  %991 = vset.pattern.permute.xlu0 0
  %992 = vperm.xlu0 %991, %v961
  %v993 = vpop.permute.xlu0 %992
  %996 = vset.pattern.permute.xlu0 0
  %997 = vperm.xlu0 %996, %v962
  %v998 = vpop.permute.xlu0 %997
  %1001 = vset.pattern.permute.xlu0 0
  %1002 = vperm.xlu0 %1001, %v963
  %v1003 = vpop.permute.xlu0 %1002
  %v1006 = vlaneseq
  %v1007 = vshrl.u32 %v1006, 7
  %v1008 = vsub.s32 0, %v1007
  %v1009 = vrot.slane %v964, %v1008
  %v1011 = vmul.f32 %v968, %v1009
  %v1012 = vmul.f32 %v973, %v1009
  %v1013 = vmul.f32 %v978, %v1009
  %v1014 = vmul.f32 %v983, %v1009
  %v1015 = vmul.f32 %v988, %v1009
  %v1016 = vmul.f32 %v993, %v1009
  %v1017 = vmul.f32 %v998, %v1009
  %v1018 = vmul.f32 %v1003, %v1009
  %1020 = vset.pattern.permute.xlu0 0
  %1021 = vperm.xlu0 %1020, %v948
  %v1022 = vpop.permute.xlu0 %1021
  %1025 = vset.pattern.permute.xlu0 0
  %1026 = vperm.xlu0 %1025, %v949
  %v1027 = vpop.permute.xlu0 %1026
  %1030 = vset.pattern.permute.xlu0 0
  %1031 = vperm.xlu0 %1030, %v950
  %v1032 = vpop.permute.xlu0 %1031
  %1035 = vset.pattern.permute.xlu0 0
  %1036 = vperm.xlu0 %1035, %v951
  %v1037 = vpop.permute.xlu0 %1036
  %1040 = vset.pattern.permute.xlu0 0
  %1041 = vperm.xlu0 %1040, %v952
  %v1042 = vpop.permute.xlu0 %1041
  %1045 = vset.pattern.permute.xlu0 0
  %1046 = vperm.xlu0 %1045, %v953
  %v1047 = vpop.permute.xlu0 %1046
  %1050 = vset.pattern.permute.xlu0 0
  %1051 = vperm.xlu0 %1050, %v954
  %v1052 = vpop.permute.xlu0 %1051
  %1055 = vset.pattern.permute.xlu0 0
  %1056 = vperm.xlu0 %1055, %v955
  %v1057 = vpop.permute.xlu0 %1056
  %v1059 = vsub.f32 %v1022, %v1011
  %v1060 = vsub.f32 %v1027, %v1012
  %v1061 = vsub.f32 %v1032, %v1013
  %v1062 = vsub.f32 %v1037, %v1014
  %v1063 = vsub.f32 %v1042, %v1015
  %v1064 = vsub.f32 %v1047, %v1016
  %v1065 = vsub.f32 %v1052, %v1017
  %v1066 = vsub.f32 %v1057, %v1018
  %vm1067 = vcmask 523264
  %1068 = vst.msk [vmem:[%s7] sm:$0xff] %vm1067, %v1059
  %1069 = vst.msk [vmem:[%s7 + $0x8] sm:$0xff] %vm1067, %v1060
  %1070 = vst.msk [vmem:[%s7 + $0x10] sm:$0xff] %vm1067, %v1061
  %1071 = vst.msk [vmem:[%s7 + $0x18] sm:$0xff] %vm1067, %v1062
  %1072 = vst.msk [vmem:[%s7 + $0x20] sm:$0xff] %vm1067, %v1063
  %1073 = vst.msk [vmem:[%s7 + $0x28] sm:$0xff] %vm1067, %v1064
  %1074 = vst.msk [vmem:[%s7 + $0x30] sm:$0xff] %vm1067, %v1065
  %1075 = vst.msk [vmem:[%s7 + $0x38] sm:$0xff] %vm1067, %v1066
  // Predicated region
  $region34: #{meta_learner_forward.1} parent=0 // pred_check
    _
  $region35: #{meta_learner_forward.1} parent=0 // pred_check_branch
    %1077 = sbr.rel (0) target = $region37
  $region36: #{meta_learner_forward.1} parent=0 // pred_region
    _
  $region37: #{meta_learner_forward.1} parent=0 // pred_fallthru
    _
  // Predicated region
  $region38: #{meta_learner_forward.1} parent=0 // pred_check
    _
  $region39: #{meta_learner_forward.1} parent=0 // pred_check_branch
    %1079 = sbr.rel (0) target = $region41
  $region40: #{meta_learner_forward.1} parent=0 // pred_region
    _
  $region41: #{meta_learner_forward.1} parent=0 // pred_fallthru
    _
  // Predicated region
  $region42: #{meta_learner_forward.1} parent=0 // pred_check
    _
  $region43: #{meta_learner_forward.1} parent=0 // pred_check_branch
    %1081 = sbr.rel (0) target = $region45
  $region44: #{meta_learner_forward.1} parent=0 // pred_region
    _
  $region45: #{meta_learner_forward.1} parent=0 // pred_fallthru
    _
  // Predicated region
  $region46: #{meta_learner_forward.1} parent=0 // pred_check
    _
  $region47: #{meta_learner_forward.1} parent=0 // pred_check_branch
    %1083 = sbr.rel (0) target = $region49
  $region48: #{meta_learner_forward.1} parent=0 // pred_region
    _
  $region49: #{meta_learner_forward.1} parent=0 // pred_fallthru
    _

</llo_original>
